<compile_context>
chip_gen: v5e
topology: v5e:2x2
jax: 0.10.0
libtpu: 0.0.40
codegen_flags: <defaults>
</compile_context>

<pallas_src>
import jax
import jax.numpy as jnp
from jax.experimental import pallas as pl
from jax.experimental.pallas import tpu as pltpu


def _kernel(x1_ref, x2_ref, o_ref):
    # Blocks are (BB, D, D): BB batch matrices per grid step.
    a = x1_ref[...]
    b = x2_ref[...]
    # t = x1 @ x2 ; s = t @ x1 ; out = s^T   (per batch matrix, f32 accumulate)
    t = jnp.einsum('bij,bjk->bik', a, b, preferred_element_type=jnp.float32)
    s = jnp.einsum('bij,bjk->bik', t.astype(a.dtype), a,
                   preferred_element_type=jnp.float32)
    # TODO(synk): compare a folded variant (einsum 'bji,bkj->bik' of x1 and t)
    # against this explicit epilogue transpose in the bundle dump (vxpose
    # shares the vector-extended slot with MXU pushes).
    o_ref[...] = jnp.transpose(s, (0, 2, 1)).astype(o_ref.dtype)


def _tpu_generation_info():
    """Returns (scoped_vmem_limit_bytes_or_None, num_tensorcores_per_chip)."""
    try:
        kind = jax.devices()[0].device_kind.lower()
    except Exception:
        kind = ""
    if "v7" in kind or "7x" in kind or "tpu7" in kind:
        return 40 * 1024 * 1024, 2          # 64 MiB physical per TC, 2 TCs
    if "v4" in kind or "v5p" in kind:
        return 64 * 1024 * 1024, 2          # megacore
    if "v5" in kind or "v6" in kind:        # v5e / v6e
        return 96 * 1024 * 1024, 1          # 128 MiB physical, 1 TC
    if "v2" in kind or "v3" in kind:
        return None, 1                      # tiny VMEM: keep compiler default
    return 32 * 1024 * 1024, 1              # unknown generation: conservative


def model_forward(x1, x2, *, use_bf16_mxu: bool = False):
    """x1, x2: (B, D, D). Returns (B, D, D) = (x1^T @ x2^T) @ x1^T per batch."""
    assert x1.shape == x2.shape and x1.ndim == 3
    B, M, N = x1.shape
    assert M == N, "matmul(x1^T, x2^T) requires square per-batch matrices"
    D = M
    out_dtype = x1.dtype

    # Optional bf16 fast path: cast in the wrapper (halves input HBM traffic),
    # keep f32 accumulation on the MXU.  NOTE: t = x1@x2 is double-rounded
    # (f32 -> bf16) before the second matmul; error grows with D.
    if use_bf16_mxu:
        x1 = x1.astype(jnp.bfloat16)
        x2 = x2.astype(jnp.bfloat16)

    in_item = jnp.dtype(x1.dtype).itemsize
    out_item = jnp.dtype(out_dtype).itemsize

    vmem_limit, num_cores = _tpu_generation_info()
    budget = vmem_limit if vmem_limit is not None else 16 * 1024 * 1024

    # Per-step VMEM footprint per batch matrix in the block:
    #   inputs:        2 operands x 2 pipeline buffers x D*D*in_item
    #   output:        2 pipeline buffers              x D*D*out_item
    #   f32 live vals: a, b (as consumed), t, s, s^T  ~ 5 x D*D*4
    per_batch_bytes = D * D * (4 * in_item + 2 * out_item + 20)
    bb_max = max(1, int(0.75 * budget) // per_batch_bytes)
    # TODO(synk): add a (tm, tn, tk)-tiled per-matrix path with an f32 VMEM
    # accumulator for D large enough that a single (D, D) matrix overflows the
    # budget (whole-matrix path tops out ~D=1.1-1.4k on v7x, ~2k on v5e/v6e).

    # Keep >= num_cores grid steps so the "parallel" batch axis can shard
    # across TensorCores (v7x / megacore); a single huge block idles a core.
    if num_cores > 1 and B >= num_cores:
        bb_max = min(bb_max, max(1, B // num_cores))
    bb_max = min(bb_max, B)

    # Prefer a divisor of B near the byte target so we never jnp.pad (padding
    # re-writes both inputs through HBM before the kernel even starts).
    BB = 1
    for d in range(bb_max, 0, -1):
        if B % d == 0:
            BB = d
            break

    if BB < max(1, bb_max // 4):
        # Rare fallback: no good divisor; pad the batch (zeros are inert here,
        # padded batches are sliced off and never read back).
        BB = bb_max
        Bp = -(-B // BB) * BB
        x1p = jnp.pad(x1, ((0, Bp - B), (0, 0), (0, 0)))
        x2p = jnp.pad(x2, ((0, Bp - B), (0, 0), (0, 0)))
    else:
        Bp, x1p, x2p = B, x1, x2

    # TODO(synk): for D < 128 the (.., D, D) output is lane-sparse (masked
    # vst.msk stores) and each DxD matmul underfills the MXU; plain XLA batched
    # dot is already near roofline there. Pallas path kept for uniformity.

    out = pl.pallas_call(
        _kernel,
        out_shape=jax.ShapeDtypeStruct((Bp, D, D), out_dtype),
        grid=(Bp // BB,),
        in_specs=[
            pl.BlockSpec((BB, D, D), lambda i: (i, 0, 0)),
            pl.BlockSpec((BB, D, D), lambda i: (i, 0, 0)),
        ],
        out_specs=pl.BlockSpec((BB, D, D), lambda i: (i, 0, 0)),
        compiler_params=pltpu.CompilerParams(
            dimension_semantics=("parallel",),
            vmem_limit_bytes=vmem_limit,
        ),
        cost_estimate=pl.CostEstimate(
            flops=4 * Bp * D ** 3,                        # two DxD matmuls/batch
            transcendentals=0,
            bytes_accessed=Bp * D * D * (2 * in_item + out_item),
        ),
    )(x1p, x2p)

    return out[:B] if Bp != B else out


if __name__ == "__main__":
    key = jax.random.PRNGKey(0)
    k1, k2 = jax.random.split(key)
    B, D = 2, 16
    x1 = jax.random.normal(k1, (B, D, D), dtype=jnp.float32)
    x2 = jax.random.normal(k2, (B, D, D), dtype=jnp.float32)

    out = model_forward(x1, x2)
    out = jax.block_until_ready(out)

    # Reference in plain JAX (mirrors the PyTorch forward exactly).
    v0 = jnp.transpose(x2, (0, 2, 1))
    v1 = jnp.transpose(x1, (0, 2, 1))
    ref = jnp.matmul(jnp.matmul(v1, v0), v1)

    assert out.shape == (B, D, D)
    # Tolerance covers the MXU's f32 matmul pass decomposition; structural bugs
    # (wrong transpose / operand order) would produce O(1-10) errors.
    assert jnp.allclose(out, ref, atol=5e-2, rtol=1e-2), (
        "max abs err = %f" % float(jnp.max(jnp.abs(out - ref))))

    print("KERNEL_OK")
</pallas_src>

<mosaic_0001>
module attributes {stable_mosaic.version = 11 : i64} {
  func.func @_kernel(%arg0: i32, %arg1: memref<2x16x16xf32, #tpu.memory_space<vmem>>, %arg2: memref<2x16x16xf32, #tpu.memory_space<vmem>>, %arg3: memref<2x16x16xf32, #tpu.memory_space<vmem>>) attributes {dimension_semantics = [#tpu.dimension_semantics<parallel>], iteration_bounds = array<i64: 1>, scalar_prefetch = 0 : i64, scratch_operands = 0 : i64, tpu.core_type = #tpu.core_type<tc>, window_params = [{transform_indices = @transform_0, window_bounds = array<i64: 2, 16, 16>}, {transform_indices = @transform_1, window_bounds = array<i64: 2, 16, 16>}, {transform_indices = @transform_2, window_bounds = array<i64: 2, 16, 16>}]} {
    %c0 = arith.constant 0 : index
    %c0_0 = arith.constant 0 : index
    %c0_1 = arith.constant 0 : index
    %0 = vector.load %arg1[%c0, %c0_0, %c0_1] : memref<2x16x16xf32, #tpu.memory_space<vmem>>, vector<2x16x16xf32>
    %c0_2 = arith.constant 0 : index
    %c0_3 = arith.constant 0 : index
    %c0_4 = arith.constant 0 : index
    %1 = vector.load %arg2[%c0_2, %c0_3, %c0_4] : memref<2x16x16xf32, #tpu.memory_space<vmem>>, vector<2x16x16xf32>
    "tpu.trace_start"() <{level = 10 : i32, message = "bij,bjk->bik"}> : () -> ()
    %cst = arith.constant dense<0.000000e+00> : vector<2x16x16xf32>
    %2 = tpu.matmul %0, %1, %cst {dimension_numbers = #tpu.dot_dimension_numbers<[2], [1], [1], [2], [0, 0, 0, 1, 1, 2], [0], [0]>} : vector<2x16x16xf32>, vector<2x16x16xf32>, vector<2x16x16xf32> -> vector<2x16x16xf32>
    %cst_5 = arith.constant dense<0.000000e+00> : vector<2x16x16xf32>
    %3 = tpu.matmul %2, %0, %cst_5 {dimension_numbers = #tpu.dot_dimension_numbers<[2], [1], [1], [2], [0, 0, 0, 1, 1, 2], [0], [0]>} : vector<2x16x16xf32>, vector<2x16x16xf32>, vector<2x16x16xf32> -> vector<2x16x16xf32>
    "tpu.trace_stop"() : () -> ()
    %4 = tpu.transpose %3, [0, 2, 1] : vector<2x16x16xf32> -> vector<2x16x16xf32>
    %c0_6 = arith.constant 0 : index
    %c0_7 = arith.constant 0 : index
    %c0_8 = arith.constant 0 : index
    %5 = vector.load %arg3[%c0_6, %c0_7, %c0_8] : memref<2x16x16xf32, #tpu.memory_space<vmem>>, vector<2x16x16xf32>
    tpu.vector_store %arg3[%c0_6, %c0_7, %c0_8], %4 {strides = array<i32>} : memref<2x16x16xf32, #tpu.memory_space<vmem>>, vector<2x16x16xf32>,
    return
  }
  func.func @transform_0(%arg0: i32) -> (i32, i32, i32) {
    %c0_i32 = arith.constant 0 : i32
    %c0_i32_0 = arith.constant 0 : i32
    %c0_i32_1 = arith.constant 0 : i32
    return %arg0, %c0_i32, %c0_i32_0 : i32, i32, i32
  }
  func.func @transform_1(%arg0: i32) -> (i32, i32, i32) {
    %c0_i32 = arith.constant 0 : i32
    %c0_i32_0 = arith.constant 0 : i32
    %c0_i32_1 = arith.constant 0 : i32
    return %arg0, %c0_i32, %c0_i32_0 : i32, i32, i32
  }
  func.func @transform_2(%arg0: i32) -> (i32, i32, i32) {
    %c0_i32 = arith.constant 0 : i32
    %c0_i32_0 = arith.constant 0 : i32
    %c0_i32_1 = arith.constant 0 : i32
    return %arg0, %c0_i32, %c0_i32_0 : i32, i32, i32
  }
}

</mosaic_0001>

<llo_original>
// kernel: tpu_custom_call.1
$region0: #{tpu_custom_call.1}
  #allocation0 [shape = 'u32[]', space=smem, size = 0x4, offset = 0x4, fixed_abs, tag = 'smem constant byte address 0x4 - core index']
  #allocation1 [shape = 'u32[72,128]{1,0:T(1,128)}', space=vmem, size = 0x9000, scoped, tag = 'internal scratch']
  %s0 = inlined_call_operand.hbm [shape: f32[2,16,16], index: 0, kind: input, shape index: {}]
  %s1 = inlined_call_operand.hbm [shape: f32[2,16,16], index: 1, kind: input, shape index: {}]
  %s2 = inlined_call_operand.hbm [shape: f32[2,16,16], index: 2, kind: output, shape index: {}]
  %s3 = sld [smem:[#allocation0]]
  $region26: #{tpu_custom_call.1} parent=0
    _
  %s5 = ssub.s32 1, %s3
  %s6 = scalar_select 0, %s5, %s3
  $region1: #{tpu_custom_call.1} parent=0
    #allocation2 [shape = 'u8[16384]{0}', space=vmem, size = 0x4000, scoped, tag = 'input window, operand 0, single buffered']
    #allocation3 [shape = 's32[1]{0}', space=sflag, size = 0x4, scoped, tag = 'scoped memory for tpu_custom_call.1']
    #allocation4 [shape = 's32[1]{0}', space=sflag, size = 0x4, scoped, tag = 'scoped memory for tpu_custom_call.1']
    #allocation5 [shape = 'u8[16384]{0}', space=vmem, size = 0x4000, scoped, tag = 'input window, operand 1, single buffered']
    #allocation6 [shape = 's32[1]{0}', space=sflag, size = 0x4, scoped, tag = 'scoped memory for tpu_custom_call.1']
    #allocation7 [shape = 'u8[16384]{0}', space=vmem, size = 0x4000, scoped, tag = 'output window, operand 0, single buffered']
    %7 = vsyncpa [#allocation3], 0
    %8 = vsyncpa [#allocation6], 0
    %9 = vsyncpa [#allocation4], 0
    // Predicated region
    $region2: #{tpu_custom_call.1} parent=1 // pred_check
      _
    $region3: #{tpu_custom_call.1} parent=1 // pred_check_branch
      %11 = sbr.rel (0) target = $region5
    $region4: #{tpu_custom_call.1} parent=1 // pred_region
      %13 = vsyncadd [#allocation3], 0
      %s14 = sshll.u32 %s0, 4
      %s15 = int_to_ptr.hbm [resolvable:$true] %s14
      %s16 = sshll.u32 [#allocation2], 4
      %s17 = int_to_ptr.vmem [resolvable:$true] %s16
      %22 = dma.hbm_to_vmem [thread:$0]  %s15, 512, %s17, [#allocation3], 128, 128, 8
    $region5: #{tpu_custom_call.1} parent=1 // pred_fallthru
      _
    // Predicated region
    $region6: #{tpu_custom_call.1} parent=1 // pred_check
      _
    $region7: #{tpu_custom_call.1} parent=1 // pred_check_branch
      %24 = sbr.rel (0) target = $region9
    $region8: #{tpu_custom_call.1} parent=1 // pred_region
      %26 = vsyncadd [#allocation6], 0
      %s27 = sshll.u32 %s1, 4
      %s28 = int_to_ptr.hbm [resolvable:$true] %s27
      %s29 = sshll.u32 [#allocation5], 4
      %s30 = int_to_ptr.vmem [resolvable:$true] %s29
      %35 = dma.hbm_to_vmem [thread:$0]  %s28, 512, %s30, [#allocation6], 128, 128, 8
    $region9: #{tpu_custom_call.1} parent=1 // pred_fallthru
      _
    // Predicated region
    $region10: #{tpu_custom_call.1} parent=1 // pred_check
      _
    $region11: #{tpu_custom_call.1} parent=1 // pred_check_branch
      %37 = sbr.rel (0) target = $region13
    $region12: #{tpu_custom_call.1} parent=1 // pred_region
      %39 = dma.done [#allocation3], 512
    $region13: #{tpu_custom_call.1} parent=1 // pred_fallthru
      _
    // Predicated region
    $region14: #{tpu_custom_call.1} parent=1 // pred_check
      _
    $region15: #{tpu_custom_call.1} parent=1 // pred_check_branch
      %41 = sbr.rel (0) target = $region17
    $region16: #{tpu_custom_call.1} parent=1 // pred_region
      %43 = dma.done [#allocation6], 512
    $region17: #{tpu_custom_call.1} parent=1 // pred_fallthru
      _
    %v44 = vld [vmem:[#allocation2] sm:$0xff]
    %v45 = vld [vmem:[#allocation2 + $0x8] sm:$0xff]
    %v46 = vld [vmem:[#allocation2 + $0x10] sm:$0xff]
    %v47 = vld [vmem:[#allocation2 + $0x18] sm:$0xff]
    %v48 = vld [vmem:[#allocation5] sm:$0xff]
    %v49 = vld [vmem:[#allocation5 + $0x8] sm:$0xff]
    %v50 = vld [vmem:[#allocation5 + $0x10] sm:$0xff]
    %v51 = vld [vmem:[#allocation5 + $0x18] sm:$0xff]
    %vm52 = vcmask 130048
    %v54 = vsel %vm52, %v44, 0
    %v57 = vsel %vm52, %v45, 0
    %59 = vmatpush.msra.mxu0 0.0
    %60 = vmatpush.msra.mxu0 0.0
    %61 = vmatpush.msra.mxu0 0.0
    %62 = vmatpush.msra.mxu0 0.0
    %63 = vmatpush.msra.mxu0 0.0
    %64 = vmatpush.msra.mxu0 0.0
    %65 = vmatpush.msra.mxu0 0.0
    %66 = vmatpush.msra.mxu0 0.0
    %67 = vmatpush.msra.mxu0 0.0
    %68 = vmatpush.msra.mxu0 0.0
    %69 = vmatpush.msra.mxu0 0.0
    %70 = vmatpush.msra.mxu0 0.0
    %71 = vmatpush.msra.mxu0 0.0
    %72 = vmatpush.msra.mxu0 0.0
    %73 = vmatpush.msra.mxu0 %v49
    %74 = vmatpush.msra.mxu0 %v48
    %75 = vmatmul.f32.gmra.mxu0 %v54
    %v76 = vpop.f32.mrf.mxu0
    %v77 = vadd.f32 0.0, %v76
    %78 = vmatmul.f32.gmra.mxu0 %v57
    %v79 = vpop.f32.mrf.mxu0
    %v80 = vadd.f32 0.0, %v79
    %81 = vdwg.mxu0
    %v83 = vsel %vm52, %v46, 0
    %v86 = vsel %vm52, %v47, 0
    %88 = vmatpush.msra.mxu0 0.0
    %89 = vmatpush.msra.mxu0 0.0
    %90 = vmatpush.msra.mxu0 0.0
    %91 = vmatpush.msra.mxu0 0.0
    %92 = vmatpush.msra.mxu0 0.0
    %93 = vmatpush.msra.mxu0 0.0
    %94 = vmatpush.msra.mxu0 0.0
    %95 = vmatpush.msra.mxu0 0.0
    %96 = vmatpush.msra.mxu0 0.0
    %97 = vmatpush.msra.mxu0 0.0
    %98 = vmatpush.msra.mxu0 0.0
    %99 = vmatpush.msra.mxu0 0.0
    %100 = vmatpush.msra.mxu0 0.0
    %101 = vmatpush.msra.mxu0 0.0
    %102 = vmatpush.msra.mxu0 %v51
    %103 = vmatpush.msra.mxu0 %v50
    %104 = vmatmul.f32.gmra.mxu0 %v83
    %v105 = vpop.f32.mrf.mxu0
    %v106 = vadd.f32 0.0, %v105
    %107 = vmatmul.f32.gmra.mxu0 %v86
    %v108 = vpop.f32.mrf.mxu0
    %v109 = vadd.f32 0.0, %v108
    %110 = vdwg.mxu0
    %v112 = vsel %vm52, %v77, 0
    %v115 = vsel %vm52, %v80, 0
    %117 = vmatpush.msra.mxu0 0.0
    %118 = vmatpush.msra.mxu0 0.0
    %119 = vmatpush.msra.mxu0 0.0
    %120 = vmatpush.msra.mxu0 0.0
    %121 = vmatpush.msra.mxu0 0.0
    %122 = vmatpush.msra.mxu0 0.0
    %123 = vmatpush.msra.mxu0 0.0
    %124 = vmatpush.msra.mxu0 0.0
    %125 = vmatpush.msra.mxu0 0.0
    %126 = vmatpush.msra.mxu0 0.0
    %127 = vmatpush.msra.mxu0 0.0
    %128 = vmatpush.msra.mxu0 0.0
    %129 = vmatpush.msra.mxu0 0.0
    %130 = vmatpush.msra.mxu0 0.0
    %131 = vmatpush.msra.mxu0 %v45
    %132 = vmatpush.msra.mxu0 %v44
    %133 = vmatmul.f32.gmra.mxu0 %v112
    %v134 = vpop.f32.mrf.mxu0
    %v135 = vadd.f32 0.0, %v134
    %136 = vmatmul.f32.gmra.mxu0 %v115
    %v137 = vpop.f32.mrf.mxu0
    %v138 = vadd.f32 0.0, %v137
    %139 = vdwg.mxu0
    %v141 = vsel %vm52, %v106, 0
    %v144 = vsel %vm52, %v109, 0
    %146 = vmatpush.msra.mxu0 0.0
    %147 = vmatpush.msra.mxu0 0.0
    %148 = vmatpush.msra.mxu0 0.0
    %149 = vmatpush.msra.mxu0 0.0
    %150 = vmatpush.msra.mxu0 0.0
    %151 = vmatpush.msra.mxu0 0.0
    %152 = vmatpush.msra.mxu0 0.0
    %153 = vmatpush.msra.mxu0 0.0
    %154 = vmatpush.msra.mxu0 0.0
    %155 = vmatpush.msra.mxu0 0.0
    %156 = vmatpush.msra.mxu0 0.0
    %157 = vmatpush.msra.mxu0 0.0
    %158 = vmatpush.msra.mxu0 0.0
    %159 = vmatpush.msra.mxu0 0.0
    %160 = vmatpush.msra.mxu0 %v47
    %161 = vmatpush.msra.mxu0 %v46
    %162 = vmatmul.f32.gmra.mxu0 %v141
    %v163 = vpop.f32.mrf.mxu0
    %v164 = vadd.f32 0.0, %v163
    %165 = vmatmul.f32.gmra.mxu0 %v144
    %v166 = vpop.f32.mrf.mxu0
    %v167 = vadd.f32 0.0, %v166
    %168 = vdwg.mxu0
    %169 = vxpose.xlu0.b32.start [1/16] %v135, 128
    %170 = vxpose.xlu0.b32.cont [2/16] %v138, 128
    %171 = vxpose.xlu0.b32.cont [3/16] 0.0, 128
    %172 = vxpose.xlu0.b32.cont [4/16] 0.0, 128
    %173 = vxpose.xlu0.b32.cont [5/16] 0.0, 128
    %174 = vxpose.xlu0.b32.cont [6/16] 0.0, 128
    %175 = vxpose.xlu0.b32.cont [7/16] 0.0, 128
    %176 = vxpose.xlu0.b32.cont [8/16] 0.0, 128
    %177 = vxpose.xlu0.b32.cont [9/16] 0.0, 128
    %178 = vxpose.xlu0.b32.cont [10/16] 0.0, 128
    %179 = vxpose.xlu0.b32.cont [11/16] 0.0, 128
    %180 = vxpose.xlu0.b32.cont [12/16] 0.0, 128
    %181 = vxpose.xlu0.b32.cont [13/16] 0.0, 128
    %182 = vxpose.xlu0.b32.cont [14/16] 0.0, 128
    %183 = vxpose.xlu0.b32.cont [15/16] 0.0, 128
    %184 = vxpose.xlu0.b32.end [16/16] 0.0, 128
    %v185 = vpop.trf.xlu0
    %v186 = vpop.trf.xlu0
    %v187 = vpop.trf.xlu0
    %v188 = vpop.trf.xlu0
    %v189 = vpop.trf.xlu0
    %v190 = vpop.trf.xlu0
    %v191 = vpop.trf.xlu0
    %v192 = vpop.trf.xlu0
    %v193 = vpop.trf.xlu0
    %v194 = vpop.trf.xlu0
    %v195 = vpop.trf.xlu0
    %v196 = vpop.trf.xlu0
    %v197 = vpop.trf.xlu0
    %v198 = vpop.trf.xlu0
    %v199 = vpop.trf.xlu0
    %v200 = vpop.trf.xlu0
    %201 = vxpose.xlu0.b32.start [1/16] %v164, 128
    %202 = vxpose.xlu0.b32.cont [2/16] %v167, 128
    %203 = vxpose.xlu0.b32.cont [3/16] 0.0, 128
    %204 = vxpose.xlu0.b32.cont [4/16] 0.0, 128
    %205 = vxpose.xlu0.b32.cont [5/16] 0.0, 128
    %206 = vxpose.xlu0.b32.cont [6/16] 0.0, 128
    %207 = vxpose.xlu0.b32.cont [7/16] 0.0, 128
    %208 = vxpose.xlu0.b32.cont [8/16] 0.0, 128
    %209 = vxpose.xlu0.b32.cont [9/16] 0.0, 128
    %210 = vxpose.xlu0.b32.cont [10/16] 0.0, 128
    %211 = vxpose.xlu0.b32.cont [11/16] 0.0, 128
    %212 = vxpose.xlu0.b32.cont [12/16] 0.0, 128
    %213 = vxpose.xlu0.b32.cont [13/16] 0.0, 128
    %214 = vxpose.xlu0.b32.cont [14/16] 0.0, 128
    %215 = vxpose.xlu0.b32.cont [15/16] 0.0, 128
    %216 = vxpose.xlu0.b32.end [16/16] 0.0, 128
    %v217 = vpop.trf.xlu0
    %v218 = vpop.trf.xlu0
    %v219 = vpop.trf.xlu0
    %v220 = vpop.trf.xlu0
    %v221 = vpop.trf.xlu0
    %v222 = vpop.trf.xlu0
    %v223 = vpop.trf.xlu0
    %v224 = vpop.trf.xlu0
    %v225 = vpop.trf.xlu0
    %v226 = vpop.trf.xlu0
    %v227 = vpop.trf.xlu0
    %v228 = vpop.trf.xlu0
    %v229 = vpop.trf.xlu0
    %v230 = vpop.trf.xlu0
    %v231 = vpop.trf.xlu0
    %v232 = vpop.trf.xlu0
    %233 = vst.msk [vmem:[#allocation7] sm:$0xff] %vm52, %v185
    %234 = vst.msk [vmem:[#allocation7 + $0x8] sm:$0xff] %vm52, %v186
    %235 = vst.msk [vmem:[#allocation7 + $0x10] sm:$0xff] %vm52, %v217
    %236 = vst.msk [vmem:[#allocation7 + $0x18] sm:$0xff] %vm52, %v218
    // Predicated region
    $region18: #{tpu_custom_call.1} parent=1 // pred_check
      _
    $region19: #{tpu_custom_call.1} parent=1 // pred_check_branch
      %238 = sbr.rel (0) target = $region21
    $region20: #{tpu_custom_call.1} parent=1 // pred_region
      %240 = vsyncadd [#allocation4], 0
      %s241 = sshll.u32 [#allocation7], 4
      %s242 = int_to_ptr.vmem [resolvable:$true] %s241
      %s243 = sshll.u32 %s2, 4
      %s244 = int_to_ptr.hbm [resolvable:$true] %s243
      %249 = dma.vmem_to_hbm [thread:$0]  %s242, 512, %s244, [#allocation4], 128, 128, 8
    $region21: #{tpu_custom_call.1} parent=1 // pred_fallthru
      _
    // Predicated region
    $region22: #{tpu_custom_call.1} parent=1 // pred_check
      _
    $region23: #{tpu_custom_call.1} parent=1 // pred_check_branch
      %251 = sbr.rel (0) target = $region25
    $region24: #{tpu_custom_call.1} parent=1 // pred_region
      %253 = dma.done [#allocation4], 512
    $region25: #{tpu_custom_call.1} parent=1 // pred_fallthru
      _
    %254 = vsyncpa [#allocation3], 1
    %255 = vsyncpa [#allocation6], 1
    %256 = vsyncpa [#allocation4], 1

</llo_original>
